<compile_context>
chip_gen: v5e
topology: v5e:2x2
jax: 0.10.0
libtpu: 0.0.40
codegen_flags: <defaults>
</compile_context>

<pallas_src>
import functools

import jax
import jax.numpy as jnp
from jax.experimental import pallas as pl
from jax.experimental.pallas import tpu as pltpu

KH, KW = 3, 5
STRIDE = 2
PAD_H, PAD_W = 1, 2

# train.get_kernel_shape() is an external dependency; we pick 'only_ellipse'.
# TODO(synk): expose kernel-shape selection if the training config is available.
_KERNEL_WEIGHT = jnp.array(
    [[0.34, 0.86, 0.99, 0.86, 0.34],
     [0.95, 1.00, 1.00, 1.00, 0.95],
     [0.34, 0.86, 0.99, 0.86, 0.34]], dtype=jnp.float32)  # (3, 5)


def _conv_kernel(xf_ref, w_ref, o_ref, *, wop, mw):
    """One batch element per grid step.

    xf_ref : (4, IC, HoP*WoP) bf16  phase-split, spatially flattened input
    w_ref  : (KH*KW, OC_p, IC) bf16 per-tap weight matrices
    o_ref  : (OC_p, Ho*WoP)   f32   'wide' output (only first Wo of every WoP
                                    column chunk is valid; sliced in JAX)
    """
    oc_p = o_ref.shape[0]
    acc = jnp.zeros((oc_p, mw), dtype=jnp.float32)
    # 15 taps, fully unrolled: each tap is one contiguous lane-dense slice of a
    # phase plane plus one small bf16 matmul accumulated in f32.
    for kh in range(KH):
        for kw in range(KW):
            p = (kh % 2) * 2 + (kw % 2)           # (row parity, col parity)
            start = (kh // 2) * wop + (kw // 2)   # offset inside the phase grid
            a = xf_ref[p, :, pl.ds(start, mw)]    # (IC, mw) bf16, lanes = pixels
            wt = w_ref[kh * KW + kw]              # (OC_p, IC) bf16
            acc = acc + jnp.dot(wt, a, preferred_element_type=jnp.float32)
    o_ref[...] = acc


def my_conv_forward(x, weight):
    """x: (N, IC, H, W) f32 NCHW; weight: (OC, IC, 3, 5) f32 OIHW -> (N, OC, Ho, Wo) f32."""
    N, IC, H, W = x.shape
    OC = weight.shape[0]

    Ho = (H + 2 * PAD_H - KH) // STRIDE + 1
    Wo = (W + 2 * PAD_W - KW) // STRIDE + 1
    # Phase-grid sizes. The +2 slack keeps every tap's flattened slice in
    # bounds (taps reach row +1 / col +2 inside a phase plane).
    HoP, WoP = Ho + 2, Wo + 2
    Hp2, Wp2 = 2 * HoP, 2 * WoP
    Mw = Ho * WoP            # "wide" pixels per image (first Wo of each WoP chunk valid)
    Min = HoP * WoP

    # Effective weight = weight * fixed elliptical mask (matches self.weight * self.w1).
    w_eff = weight * _KERNEL_WEIGHT[None, None, :, :]

    # Per-tap (OC, IC) weight matrices, OC padded to a sublane multiple, bf16.
    OC_p = ((OC + 7) // 8) * 8
    w_taps = jnp.transpose(w_eff, (2, 3, 0, 1)).reshape(KH * KW, OC, IC)
    if OC_p != OC:
        w_taps = jnp.pad(w_taps, ((0, 0), (0, OC_p - OC), (0, 0)))
    w_taps = w_taps.astype(jnp.bfloat16)

    # Spatial zero pad: top/left are the conv padding; bottom/right padded a bit
    # further so the padded extent is exactly (2*HoP, 2*WoP). The extra zeros
    # are never read by valid output positions.
    x_pad = jnp.pad(x, ((0, 0), (0, 0),
                        (PAD_H, Hp2 - H - PAD_H),
                        (PAD_W, Wp2 - W - PAD_W)))

    # Space-to-depth phase split: (N, IC, 2*HoP, 2*WoP) -> (N, 4, IC, HoP*WoP).
    # Phase p = 2*(row parity) + (col parity). After this, tap (kh, kw) is the
    # contiguous slice [(kh//2)*WoP + kw//2 : ... + Ho*WoP] of phase
    # (kh%2, kw%2) -- no strided gathers, no 15x patch blowup in HBM.
    x_ph = x_pad.reshape(N, IC, HoP, 2, WoP, 2)
    x_ph = jnp.transpose(x_ph, (0, 3, 5, 1, 2, 4)).reshape(N, 4, IC, Min)
    x_ph = x_ph.astype(jnp.bfloat16)

    out_wide = pl.pallas_call(
        functools.partial(_conv_kernel, wop=WoP, mw=Mw),
        out_shape=jax.ShapeDtypeStruct((N, OC_p, Mw), jnp.float32),
        grid=(N,),
        in_specs=[
            pl.BlockSpec((None, 4, IC, Min), lambda n: (n, 0, 0, 0)),   # x phases
            pl.BlockSpec((KH * KW, OC_p, IC), lambda n: (0, 0, 0)),     # tap weights
        ],
        out_specs=pl.BlockSpec((None, OC_p, Mw), lambda n: (n, 0, 0)),
        compiler_params=pltpu.CompilerParams(
            dimension_semantics=("parallel",)),
    )(x_ph, w_taps)

    # Drop the per-row overcompute margin and any OC padding. The result is
    # already NCHW -- no trailing layout transpose.
    return out_wide.reshape(N, OC_p, Ho, WoP)[:, :OC, :, :Wo]


if __name__ == "__main__":
    key = jax.random.PRNGKey(0)
    kx, kw = jax.random.split(key)

    N, IC, H, W = 2, 4, 16, 16
    OC = 8

    x = jax.random.normal(kx, (N, IC, H, W), dtype=jnp.float32)
    weight = jax.random.normal(kw, (OC, IC, KH, KW), dtype=jnp.float32) * 0.1

    y = my_conv_forward(x, weight)
    y = jax.block_until_ready(y)

    w_eff = weight * _KERNEL_WEIGHT[None, None, :, :]

    # Tight check: same bf16-rounded inputs, f32 accumulation (matches kernel math).
    x_b = x.astype(jnp.bfloat16).astype(jnp.float32)
    w_b = w_eff.astype(jnp.bfloat16).astype(jnp.float32)
    y_ref = jax.lax.conv_general_dilated(
        x_b, w_b, window_strides=(STRIDE, STRIDE),
        padding=((PAD_H, PAD_H), (PAD_W, PAD_W)),
        dimension_numbers=("NCHW", "OIHW", "NCHW"),
        preferred_element_type=jnp.float32)
    assert y.shape == y_ref.shape == (N, OC, H // 2, W // 2)
    assert jnp.allclose(y, y_ref, atol=1e-4, rtol=1e-4), \
        float(jnp.max(jnp.abs(y - y_ref)))

    # Loose sanity check against the full-f32 reference (bf16 input rounding only).
    y_f32 = jax.lax.conv_general_dilated(
        x, w_eff, window_strides=(STRIDE, STRIDE),
        padding=((PAD_H, PAD_H), (PAD_W, PAD_W)),
        dimension_numbers=("NCHW", "OIHW", "NCHW"))
    assert jnp.allclose(y, y_f32, atol=1e-1, rtol=1e-1), \
        float(jnp.max(jnp.abs(y - y_f32)))

    print("KERNEL_OK")
</pallas_src>

<mosaic_0001>
module attributes {stable_mosaic.version = 11 : i64} {
  func.func @_conv_kernel(%arg0: i32, %arg1: memref<1x4x4x100xbf16, #tpu.memory_space<vmem>>, %arg2: memref<15x8x4xbf16, #tpu.memory_space<vmem>>, %arg3: memref<1x8x80xf32, #tpu.memory_space<vmem>>) attributes {dimension_semantics = [#tpu.dimension_semantics<parallel>], iteration_bounds = array<i64: 2>, scalar_prefetch = 0 : i64, scratch_operands = 0 : i64, tpu.core_type = #tpu.core_type<tc>, window_params = [{transform_indices = @transform_0, window_bounds = array<i64: 1, 4, 4, 100>}, {pipeline_mode = #tpu.pipeline_mode<synchronous>, transform_indices = @transform_1, window_bounds = array<i64: 15, 8, 4>}, {transform_indices = @transform_2, window_bounds = array<i64: 1, 8, 80>}]} {
    %cst = arith.constant 0.000000e+00 : f32
    %0 = vector.broadcast %cst : f32 to vector<8x80xf32>
    %c0 = arith.constant 0 : index
    %c0_0 = arith.constant 0 : index
    %c0_1 = arith.constant 0 : index
    %c0_2 = arith.constant 0 : index
    %1 = vector.load %arg1[%c0, %c0_0, %c0_1, %c0_2] : memref<1x4x4x100xbf16, #tpu.memory_space<vmem>>, vector<1x1x4x80xbf16>
    %2 = vector.shape_cast %1 : vector<1x1x4x80xbf16> to vector<4x80xbf16>
    %c0_3 = arith.constant 0 : index
    %c0_4 = arith.constant 0 : index
    %c0_5 = arith.constant 0 : index
    %3 = vector.load %arg2[%c0_3, %c0_4, %c0_5] : memref<15x8x4xbf16, #tpu.memory_space<vmem>>, vector<1x8x4xbf16>
    %4 = vector.shape_cast %3 : vector<1x8x4xbf16> to vector<8x4xbf16>
    %cst_6 = arith.constant dense<0.000000e+00> : vector<8x80xf32>
    %5 = tpu.matmul %4, %2, %cst_6 {dimension_numbers = #tpu.dot_dimension_numbers<[1], [0], [0], [1], [0, 0, 1, 1], [], []>} : vector<8x4xbf16>, vector<4x80xbf16>, vector<8x80xf32> -> vector<8x80xf32>
    %6 = arith.addf %0, %5 : vector<8x80xf32>
    %c0_7 = arith.constant 0 : index
    %c1 = arith.constant 1 : index
    %c0_8 = arith.constant 0 : index
    %c0_9 = arith.constant 0 : index
    %7 = vector.load %arg1[%c0_7, %c1, %c0_8, %c0_9] : memref<1x4x4x100xbf16, #tpu.memory_space<vmem>>, vector<1x1x4x80xbf16>
    %8 = vector.shape_cast %7 : vector<1x1x4x80xbf16> to vector<4x80xbf16>
    %c1_10 = arith.constant 1 : index
    %c0_11 = arith.constant 0 : index
    %c0_12 = arith.constant 0 : index
    %9 = vector.load %arg2[%c1_10, %c0_11, %c0_12] : memref<15x8x4xbf16, #tpu.memory_space<vmem>>, vector<1x8x4xbf16>
    %10 = vector.shape_cast %9 : vector<1x8x4xbf16> to vector<8x4xbf16>
    %cst_13 = arith.constant dense<0.000000e+00> : vector<8x80xf32>
    %11 = tpu.matmul %10, %8, %cst_13 {dimension_numbers = #tpu.dot_dimension_numbers<[1], [0], [0], [1], [0, 0, 1, 1], [], []>} : vector<8x4xbf16>, vector<4x80xbf16>, vector<8x80xf32> -> vector<8x80xf32>
    %12 = arith.addf %6, %11 : vector<8x80xf32>
    %c0_14 = arith.constant 0 : index
    %c0_15 = arith.constant 0 : index
    %c0_16 = arith.constant 0 : index
    %c1_17 = arith.constant 1 : index
    %13 = vector.load %arg1[%c0_14, %c0_15, %c0_16, %c1_17] : memref<1x4x4x100xbf16, #tpu.memory_space<vmem>>, vector<1x1x4x80xbf16>
    %14 = vector.shape_cast %13 : vector<1x1x4x80xbf16> to vector<4x80xbf16>
    %c2 = arith.constant 2 : index
    %c0_18 = arith.constant 0 : index
    %c0_19 = arith.constant 0 : index
    %15 = vector.load %arg2[%c2, %c0_18, %c0_19] : memref<15x8x4xbf16, #tpu.memory_space<vmem>>, vector<1x8x4xbf16>
    %16 = vector.shape_cast %15 : vector<1x8x4xbf16> to vector<8x4xbf16>
    %cst_20 = arith.constant dense<0.000000e+00> : vector<8x80xf32>
    %17 = tpu.matmul %16, %14, %cst_20 {dimension_numbers = #tpu.dot_dimension_numbers<[1], [0], [0], [1], [0, 0, 1, 1], [], []>} : vector<8x4xbf16>, vector<4x80xbf16>, vector<8x80xf32> -> vector<8x80xf32>
    %18 = arith.addf %12, %17 : vector<8x80xf32>
    %c0_21 = arith.constant 0 : index
    %c1_22 = arith.constant 1 : index
    %c0_23 = arith.constant 0 : index
    %c1_24 = arith.constant 1 : index
    %19 = vector.load %arg1[%c0_21, %c1_22, %c0_23, %c1_24] : memref<1x4x4x100xbf16, #tpu.memory_space<vmem>>, vector<1x1x4x80xbf16>
    %20 = vector.shape_cast %19 : vector<1x1x4x80xbf16> to vector<4x80xbf16>
    %c3 = arith.constant 3 : index
    %c0_25 = arith.constant 0 : index
    %c0_26 = arith.constant 0 : index
    %21 = vector.load %arg2[%c3, %c0_25, %c0_26] : memref<15x8x4xbf16, #tpu.memory_space<vmem>>, vector<1x8x4xbf16>
    %22 = vector.shape_cast %21 : vector<1x8x4xbf16> to vector<8x4xbf16>
    %cst_27 = arith.constant dense<0.000000e+00> : vector<8x80xf32>
    %23 = tpu.matmul %22, %20, %cst_27 {dimension_numbers = #tpu.dot_dimension_numbers<[1], [0], [0], [1], [0, 0, 1, 1], [], []>} : vector<8x4xbf16>, vector<4x80xbf16>, vector<8x80xf32> -> vector<8x80xf32>
    %24 = arith.addf %18, %23 : vector<8x80xf32>
    %c0_28 = arith.constant 0 : index
    %c0_29 = arith.constant 0 : index
    %c0_30 = arith.constant 0 : index
    %c2_31 = arith.constant 2 : index
    %25 = vector.load %arg1[%c0_28, %c0_29, %c0_30, %c2_31] : memref<1x4x4x100xbf16, #tpu.memory_space<vmem>>, vector<1x1x4x80xbf16>
    %26 = vector.shape_cast %25 : vector<1x1x4x80xbf16> to vector<4x80xbf16>
    %c4 = arith.constant 4 : index
    %c0_32 = arith.constant 0 : index
    %c0_33 = arith.constant 0 : index
    %27 = vector.load %arg2[%c4, %c0_32, %c0_33] : memref<15x8x4xbf16, #tpu.memory_space<vmem>>, vector<1x8x4xbf16>
    %28 = vector.shape_cast %27 : vector<1x8x4xbf16> to vector<8x4xbf16>
    %cst_34 = arith.constant dense<0.000000e+00> : vector<8x80xf32>
    %29 = tpu.matmul %28, %26, %cst_34 {dimension_numbers = #tpu.dot_dimension_numbers<[1], [0], [0], [1], [0, 0, 1, 1], [], []>} : vector<8x4xbf16>, vector<4x80xbf16>, vector<8x80xf32> -> vector<8x80xf32>
    %30 = arith.addf %24, %29 : vector<8x80xf32>
    %c0_35 = arith.constant 0 : index
    %c2_36 = arith.constant 2 : index
    %c0_37 = arith.constant 0 : index
    %c0_38 = arith.constant 0 : index
    %31 = vector.load %arg1[%c0_35, %c2_36, %c0_37, %c0_38] : memref<1x4x4x100xbf16, #tpu.memory_space<vmem>>, vector<1x1x4x80xbf16>
    %32 = vector.shape_cast %31 : vector<1x1x4x80xbf16> to vector<4x80xbf16>
    %c5 = arith.constant 5 : index
    %c0_39 = arith.constant 0 : index
    %c0_40 = arith.constant 0 : index
    %33 = vector.load %arg2[%c5, %c0_39, %c0_40] : memref<15x8x4xbf16, #tpu.memory_space<vmem>>, vector<1x8x4xbf16>
    %34 = vector.shape_cast %33 : vector<1x8x4xbf16> to vector<8x4xbf16>
    %cst_41 = arith.constant dense<0.000000e+00> : vector<8x80xf32>
    %35 = tpu.matmul %34, %32, %cst_41 {dimension_numbers = #tpu.dot_dimension_numbers<[1], [0], [0], [1], [0, 0, 1, 1], [], []>} : vector<8x4xbf16>, vector<4x80xbf16>, vector<8x80xf32> -> vector<8x80xf32>
    %36 = arith.addf %30, %35 : vector<8x80xf32>
    %c0_42 = arith.constant 0 : index
    %c3_43 = arith.constant 3 : index
    %c0_44 = arith.constant 0 : index
    %c0_45 = arith.constant 0 : index
    %37 = vector.load %arg1[%c0_42, %c3_43, %c0_44, %c0_45] : memref<1x4x4x100xbf16, #tpu.memory_space<vmem>>, vector<1x1x4x80xbf16>
    %38 = vector.shape_cast %37 : vector<1x1x4x80xbf16> to vector<4x80xbf16>
    %c6 = arith.constant 6 : index
    %c0_46 = arith.constant 0 : index
    %c0_47 = arith.constant 0 : index
    %39 = vector.load %arg2[%c6, %c0_46, %c0_47] : memref<15x8x4xbf16, #tpu.memory_space<vmem>>, vector<1x8x4xbf16>
    %40 = vector.shape_cast %39 : vector<1x8x4xbf16> to vector<8x4xbf16>
    %cst_48 = arith.constant dense<0.000000e+00> : vector<8x80xf32>
    %41 = tpu.matmul %40, %38, %cst_48 {dimension_numbers = #tpu.dot_dimension_numbers<[1], [0], [0], [1], [0, 0, 1, 1], [], []>} : vector<8x4xbf16>, vector<4x80xbf16>, vector<8x80xf32> -> vector<8x80xf32>
    %42 = arith.addf %36, %41 : vector<8x80xf32>
    %c0_49 = arith.constant 0 : index
    %c2_50 = arith.constant 2 : index
    %c0_51 = arith.constant 0 : index
    %c1_52 = arith.constant 1 : index
    %43 = vector.load %arg1[%c0_49, %c2_50, %c0_51, %c1_52] : memref<1x4x4x100xbf16, #tpu.memory_space<vmem>>, vector<1x1x4x80xbf16>
    %44 = vector.shape_cast %43 : vector<1x1x4x80xbf16> to vector<4x80xbf16>
    %c7 = arith.constant 7 : index
    %c0_53 = arith.constant 0 : index
    %c0_54 = arith.constant 0 : index
    %45 = vector.load %arg2[%c7, %c0_53, %c0_54] : memref<15x8x4xbf16, #tpu.memory_space<vmem>>, vector<1x8x4xbf16>
    %46 = vector.shape_cast %45 : vector<1x8x4xbf16> to vector<8x4xbf16>
    %cst_55 = arith.constant dense<0.000000e+00> : vector<8x80xf32>
    %47 = tpu.matmul %46, %44, %cst_55 {dimension_numbers = #tpu.dot_dimension_numbers<[1], [0], [0], [1], [0, 0, 1, 1], [], []>} : vector<8x4xbf16>, vector<4x80xbf16>, vector<8x80xf32> -> vector<8x80xf32>
    %48 = arith.addf %42, %47 : vector<8x80xf32>
    %c0_56 = arith.constant 0 : index
    %c3_57 = arith.constant 3 : index
    %c0_58 = arith.constant 0 : index
    %c1_59 = arith.constant 1 : index
    %49 = vector.load %arg1[%c0_56, %c3_57, %c0_58, %c1_59] : memref<1x4x4x100xbf16, #tpu.memory_space<vmem>>, vector<1x1x4x80xbf16>
    %50 = vector.shape_cast %49 : vector<1x1x4x80xbf16> to vector<4x80xbf16>
    %c8 = arith.constant 8 : index
    %c0_60 = arith.constant 0 : index
    %c0_61 = arith.constant 0 : index
    %51 = vector.load %arg2[%c8, %c0_60, %c0_61] : memref<15x8x4xbf16, #tpu.memory_space<vmem>>, vector<1x8x4xbf16>
    %52 = vector.shape_cast %51 : vector<1x8x4xbf16> to vector<8x4xbf16>
    %cst_62 = arith.constant dense<0.000000e+00> : vector<8x80xf32>
    %53 = tpu.matmul %52, %50, %cst_62 {dimension_numbers = #tpu.dot_dimension_numbers<[1], [0], [0], [1], [0, 0, 1, 1], [], []>} : vector<8x4xbf16>, vector<4x80xbf16>, vector<8x80xf32> -> vector<8x80xf32>
    %54 = arith.addf %48, %53 : vector<8x80xf32>
    %c0_63 = arith.constant 0 : index
    %c2_64 = arith.constant 2 : index
    %c0_65 = arith.constant 0 : index
    %c2_66 = arith.constant 2 : index
    %55 = vector.load %arg1[%c0_63, %c2_64, %c0_65, %c2_66] : memref<1x4x4x100xbf16, #tpu.memory_space<vmem>>, vector<1x1x4x80xbf16>
    %56 = vector.shape_cast %55 : vector<1x1x4x80xbf16> to vector<4x80xbf16>
    %c9 = arith.constant 9 : index
    %c0_67 = arith.constant 0 : index
    %c0_68 = arith.constant 0 : index
    %57 = vector.load %arg2[%c9, %c0_67, %c0_68] : memref<15x8x4xbf16, #tpu.memory_space<vmem>>, vector<1x8x4xbf16>
    %58 = vector.shape_cast %57 : vector<1x8x4xbf16> to vector<8x4xbf16>
    %cst_69 = arith.constant dense<0.000000e+00> : vector<8x80xf32>
    %59 = tpu.matmul %58, %56, %cst_69 {dimension_numbers = #tpu.dot_dimension_numbers<[1], [0], [0], [1], [0, 0, 1, 1], [], []>} : vector<8x4xbf16>, vector<4x80xbf16>, vector<8x80xf32> -> vector<8x80xf32>
    %60 = arith.addf %54, %59 : vector<8x80xf32>
    %c0_70 = arith.constant 0 : index
    %c0_71 = arith.constant 0 : index
    %c0_72 = arith.constant 0 : index
    %c10 = arith.constant 10 : index
    %61 = vector.load %arg1[%c0_70, %c0_71, %c0_72, %c10] : memref<1x4x4x100xbf16, #tpu.memory_space<vmem>>, vector<1x1x4x80xbf16>
    %62 = vector.shape_cast %61 : vector<1x1x4x80xbf16> to vector<4x80xbf16>
    %c10_73 = arith.constant 10 : index
    %c0_74 = arith.constant 0 : index
    %c0_75 = arith.constant 0 : index
    %63 = vector.load %arg2[%c10_73, %c0_74, %c0_75] : memref<15x8x4xbf16, #tpu.memory_space<vmem>>, vector<1x8x4xbf16>
    %64 = vector.shape_cast %63 : vector<1x8x4xbf16> to vector<8x4xbf16>
    %cst_76 = arith.constant dense<0.000000e+00> : vector<8x80xf32>
    %65 = tpu.matmul %64, %62, %cst_76 {dimension_numbers = #tpu.dot_dimension_numbers<[1], [0], [0], [1], [0, 0, 1, 1], [], []>} : vector<8x4xbf16>, vector<4x80xbf16>, vector<8x80xf32> -> vector<8x80xf32>
    %66 = arith.addf %60, %65 : vector<8x80xf32>
    %c0_77 = arith.constant 0 : index
    %c1_78 = arith.constant 1 : index
    %c0_79 = arith.constant 0 : index
    %c10_80 = arith.constant 10 : index
    %67 = vector.load %arg1[%c0_77, %c1_78, %c0_79, %c10_80] : memref<1x4x4x100xbf16, #tpu.memory_space<vmem>>, vector<1x1x4x80xbf16>
    %68 = vector.shape_cast %67 : vector<1x1x4x80xbf16> to vector<4x80xbf16>
    %c11 = arith.constant 11 : index
    %c0_81 = arith.constant 0 : index
    %c0_82 = arith.constant 0 : index
    %69 = vector.load %arg2[%c11, %c0_81, %c0_82] : memref<15x8x4xbf16, #tpu.memory_space<vmem>>, vector<1x8x4xbf16>
    %70 = vector.shape_cast %69 : vector<1x8x4xbf16> to vector<8x4xbf16>
    %cst_83 = arith.constant dense<0.000000e+00> : vector<8x80xf32>
    %71 = tpu.matmul %70, %68, %cst_83 {dimension_numbers = #tpu.dot_dimension_numbers<[1], [0], [0], [1], [0, 0, 1, 1], [], []>} : vector<8x4xbf16>, vector<4x80xbf16>, vector<8x80xf32> -> vector<8x80xf32>
    %72 = arith.addf %66, %71 : vector<8x80xf32>
    %c0_84 = arith.constant 0 : index
    %c0_85 = arith.constant 0 : index
    %c0_86 = arith.constant 0 : index
    %c11_87 = arith.constant 11 : index
    %73 = vector.load %arg1[%c0_84, %c0_85, %c0_86, %c11_87] : memref<1x4x4x100xbf16, #tpu.memory_space<vmem>>, vector<1x1x4x80xbf16>
    %74 = vector.shape_cast %73 : vector<1x1x4x80xbf16> to vector<4x80xbf16>
    %c12 = arith.constant 12 : index
    %c0_88 = arith.constant 0 : index
    %c0_89 = arith.constant 0 : index
    %75 = vector.load %arg2[%c12, %c0_88, %c0_89] : memref<15x8x4xbf16, #tpu.memory_space<vmem>>, vector<1x8x4xbf16>
    %76 = vector.shape_cast %75 : vector<1x8x4xbf16> to vector<8x4xbf16>
    %cst_90 = arith.constant dense<0.000000e+00> : vector<8x80xf32>
    %77 = tpu.matmul %76, %74, %cst_90 {dimension_numbers = #tpu.dot_dimension_numbers<[1], [0], [0], [1], [0, 0, 1, 1], [], []>} : vector<8x4xbf16>, vector<4x80xbf16>, vector<8x80xf32> -> vector<8x80xf32>
    %78 = arith.addf %72, %77 : vector<8x80xf32>
    %c0_91 = arith.constant 0 : index
    %c1_92 = arith.constant 1 : index
    %c0_93 = arith.constant 0 : index
    %c11_94 = arith.constant 11 : index
    %79 = vector.load %arg1[%c0_91, %c1_92, %c0_93, %c11_94] : memref<1x4x4x100xbf16, #tpu.memory_space<vmem>>, vector<1x1x4x80xbf16>
    %80 = vector.shape_cast %79 : vector<1x1x4x80xbf16> to vector<4x80xbf16>
    %c13 = arith.constant 13 : index
    %c0_95 = arith.constant 0 : index
    %c0_96 = arith.constant 0 : index
    %81 = vector.load %arg2[%c13, %c0_95, %c0_96] : memref<15x8x4xbf16, #tpu.memory_space<vmem>>, vector<1x8x4xbf16>
    %82 = vector.shape_cast %81 : vector<1x8x4xbf16> to vector<8x4xbf16>
    %cst_97 = arith.constant dense<0.000000e+00> : vector<8x80xf32>
    %83 = tpu.matmul %82, %80, %cst_97 {dimension_numbers = #tpu.dot_dimension_numbers<[1], [0], [0], [1], [0, 0, 1, 1], [], []>} : vector<8x4xbf16>, vector<4x80xbf16>, vector<8x80xf32> -> vector<8x80xf32>
    %84 = arith.addf %78, %83 : vector<8x80xf32>
    %c0_98 = arith.constant 0 : index
    %c0_99 = arith.constant 0 : index
    %c0_100 = arith.constant 0 : index
    %c12_101 = arith.constant 12 : index
    %85 = vector.load %arg1[%c0_98, %c0_99, %c0_100, %c12_101] : memref<1x4x4x100xbf16, #tpu.memory_space<vmem>>, vector<1x1x4x80xbf16>
    %86 = vector.shape_cast %85 : vector<1x1x4x80xbf16> to vector<4x80xbf16>
    %c14 = arith.constant 14 : index
    %c0_102 = arith.constant 0 : index
    %c0_103 = arith.constant 0 : index
    %87 = vector.load %arg2[%c14, %c0_102, %c0_103] : memref<15x8x4xbf16, #tpu.memory_space<vmem>>, vector<1x8x4xbf16>
    %88 = vector.shape_cast %87 : vector<1x8x4xbf16> to vector<8x4xbf16>
    %cst_104 = arith.constant dense<0.000000e+00> : vector<8x80xf32>
    %89 = tpu.matmul %88, %86, %cst_104 {dimension_numbers = #tpu.dot_dimension_numbers<[1], [0], [0], [1], [0, 0, 1, 1], [], []>} : vector<8x4xbf16>, vector<4x80xbf16>, vector<8x80xf32> -> vector<8x80xf32>
    %90 = arith.addf %84, %89 : vector<8x80xf32>
    %c0_105 = arith.constant 0 : index
    %c0_106 = arith.constant 0 : index
    %c0_107 = arith.constant 0 : index
    %91 = vector.load %arg3[%c0_105, %c0_106, %c0_107] : memref<1x8x80xf32, #tpu.memory_space<vmem>>, vector<1x8x80xf32>
    %92 = vector.shape_cast %91 : vector<1x8x80xf32> to vector<8x80xf32>
    %93 = vector.shape_cast %90 : vector<8x80xf32> to vector<1x8x80xf32>
    tpu.vector_store %arg3[%c0_105, %c0_106, %c0_107], %93 {strides = array<i32>} : memref<1x8x80xf32, #tpu.memory_space<vmem>>, vector<1x8x80xf32>,
    return
  }
  func.func @transform_0(%arg0: i32) -> (i32, i32, i32, i32) {
    %c0_i32 = arith.constant 0 : i32
    %c0_i32_0 = arith.constant 0 : i32
    %c0_i32_1 = arith.constant 0 : i32
    %c0_i32_2 = arith.constant 0 : i32
    return %arg0, %c0_i32, %c0_i32_0, %c0_i32_1 : i32, i32, i32, i32
  }
  func.func @transform_1(%arg0: i32) -> (i32, i32, i32) {
    %c0_i32 = arith.constant 0 : i32
    %c0_i32_0 = arith.constant 0 : i32
    %c0_i32_1 = arith.constant 0 : i32
    %c0_i32_2 = arith.constant 0 : i32
    return %c0_i32, %c0_i32_0, %c0_i32_1 : i32, i32, i32
  }
  func.func @transform_2(%arg0: i32) -> (i32, i32, i32) {
    %c0_i32 = arith.constant 0 : i32
    %c0_i32_0 = arith.constant 0 : i32
    %c0_i32_1 = arith.constant 0 : i32
    return %arg0, %c0_i32, %c0_i32_0 : i32, i32, i32
  }
}

</mosaic_0001>

<llo_original>
// kernel: tpu_custom_call.1
$region0: #{tpu_custom_call.1}
  #allocation0 [shape = 'u32[]', space=smem, size = 0x4, offset = 0x4, fixed_abs, tag = 'smem constant byte address 0x4 - core index']
  #allocation1 [shape = 'u32[72,128]{1,0:T(1,128)}', space=vmem, size = 0x9000, scoped, tag = 'internal scratch']
  %s0 = inlined_call_operand.vmem [shape: bf16[2,4,4,100], index: 0, kind: input, shape index: {}]
  %s1 = inlined_call_operand.vmem [shape: bf16[15,8,4], index: 1, kind: input, shape index: {}]
  %s2 = inlined_call_operand.hbm [shape: f32[2,8,80], index: 2, kind: output, shape index: {}]
  %s3 = sld [smem:[#allocation0]]
  $region41: #{tpu_custom_call.1} parent=0
    _
  %s5 = ssub.s32 1, %s3
  %s6 = scalar_select 0, %s5, %s3
  $region1: #{tpu_custom_call.1} parent=0
    #allocation2 [shape = 'u8[8192]{0}', space=vmem, size = 0x2000, scoped, tag = 'output window, operand 0']
    #allocation3 [shape = 's32[2]{0}', space=sflag, size = 0x8, scoped, tag = 'scoped memory for tpu_custom_call.1']
    %7 = vsyncpa [#allocation3], 0
    %s8 = scalar_lea.sflag [#allocation3], 1
    %9 = vsyncpa %s8, 0
    loop: start=0, step=1, limit=4
    $region2: #{tpu_custom_call.1} parent=1 // loop_pre_header
      _
    $region3: #{tpu_custom_call.1} parent=1 // loop_header
      %s11 = sphi 0, %s15
      %p12 = scmp.ge.s32.totalorder %s11, 4
      %s21 = sphi 0, %s23
      %s24 = sphi 0, %s21
      %s25 = sphi 0, %s24
      %s41 = sphi 0, %s25
      %s45 = sphi 0, %s45
      %s47 = sphi 0, %s45
      %s48 = sphi 0, %s47
      %s62 = sphi 0, %s48
      %s68 = sphi 0, %s70
      %s71 = sphi 0, %s68
      %s72 = sphi 0, %s71
      %s88 = sphi 0, %s72
    $region4: #{tpu_custom_call.1} parent=1 // loop_header_branch
      %14 = sbr.rel (%p12) target = $region8
    $region5: #{tpu_custom_call.1} parent=1 // loop_body
      %s16 = ssub.s32 %s11, 1
      %s17 = ssub.s32 %s11, 2
      %s18 = sadd.s32 %s11, 1
      %s19 = ssub.s32 %s11, %s18
      %p20 = scmp.eq.s32.totalorder %s19, 0
      %s22 = sadd.s32 %s21, 1
      %s23 = scalar_select %p20, %s21, %s22
      %p26 = pneg %p20
      %p27 = scmp.eq.s32.totalorder %s11, 1
      %p28 = por %p26, %p27
      %p29 = scmp.ne.s32.totalorder %s21, %s24
      %p30 = scmp.eq.s32.totalorder %s11, 0
      %p31 = por %p29, %p30
      %p32 = scmp.ne.s32.totalorder %s21, %s24
      %p33 = scmp.eq.s32.totalorder %s16, 1
      %p34 = por %p32, %p33
      %p35 = scmp.ne.s32.totalorder %s24, %s25
      %p36 = scmp.eq.s32.totalorder %s16, 0
      %p37 = por %p35, %p36
      %p38 = scmp.ne.s32.totalorder %s24, %s25
      %p39 = scmp.eq.s32.totalorder %s17, 1
      %p40 = por %p38, %p39
      %p42 = scmp.ne.s32.totalorder %s25, %s41
      %p43 = scmp.eq.s32.totalorder %s17, 0
      %p44 = por %p42, %p43
      %s46 = sadd.s32 %s45, 1
      %p49 = scmp.eq.s32.totalorder %s11, 1
      %p50 = scmp.ne.s32.totalorder %s45, %s47
      %p51 = scmp.eq.s32.totalorder %s11, 0
      %p52 = por %p50, %p51
      %p53 = scmp.ne.s32.totalorder %s45, %s47
      %p54 = scmp.eq.s32.totalorder %s16, 1
      %p55 = por %p53, %p54
      %p56 = scmp.ne.s32.totalorder %s47, %s48
      %p57 = scmp.eq.s32.totalorder %s16, 0
      %p58 = por %p56, %p57
      %p59 = scmp.ne.s32.totalorder %s47, %s48
      %p60 = scmp.eq.s32.totalorder %s17, 1
      %p61 = por %p59, %p60
      %p63 = scmp.ne.s32.totalorder %s48, %s62
      %p64 = scmp.eq.s32.totalorder %s17, 0
      %p65 = por %p63, %p64
      %s66 = ssub.s32 %s11, %s18
      %p67 = scmp.eq.s32.totalorder %s66, 0
      %s69 = sadd.s32 %s68, 1
      %s70 = scalar_select %p67, %s68, %s69
      %p73 = pneg %p67
      %p74 = scmp.eq.s32.totalorder %s11, 1
      %p75 = por %p73, %p74
      %p76 = scmp.ne.s32.totalorder %s68, %s71
      %p77 = scmp.eq.s32.totalorder %s11, 0
      %p78 = por %p76, %p77
      %p79 = scmp.ne.s32.totalorder %s68, %s71
      %p80 = scmp.eq.s32.totalorder %s16, 1
      %p81 = por %p79, %p80
      %p82 = scmp.ne.s32.totalorder %s71, %s72
      %p83 = scmp.eq.s32.totalorder %s16, 0
      %p84 = por %p82, %p83
      %p85 = scmp.ne.s32.totalorder %s71, %s72
      %p86 = scmp.eq.s32.totalorder %s17, 1
      %p87 = por %p85, %p86
      %p89 = scmp.ne.s32.totalorder %s72, %s88
      %p90 = scmp.eq.s32.totalorder %s17, 0
      %p91 = por %p89, %p90
      %p92 = scmp.le.s32.totalorder 1, %s11
      %p93 = scmp.lt.s32.totalorder %s11, 3
      %p94 = pnand %p92, %p93
      %p95 = pneg %p94
      // Predicated region
      $region9: #{tpu_custom_call.1} parent=5 // pred_check
        _
      $region10: #{tpu_custom_call.1} parent=5 // pred_check_branch
        %97 = sbr.rel (%p94) target = $region12
      $region11: #{tpu_custom_call.1} parent=5 // pred_region
        %s98 = ssub.s32 %s11, 1
        // Predicated region
        $region13: #{tpu_custom_call.1} parent=11 // pred_check
          %p99 = pneg %p58
        $region14: #{tpu_custom_call.1} parent=11 // pred_check_branch
          %101 = sbr.rel (%p99) target = $region16
        $region15: #{tpu_custom_call.1} parent=11 // pred_region
          _
        $region16: #{tpu_custom_call.1} parent=11 // pred_fallthru
          _
      $region12: #{tpu_custom_call.1} parent=5 // pred_fallthru
        _
      %p102 = scmp.lt.s32.totalorder %s11, 2
      // Predicated region
      $region17: #{tpu_custom_call.1} parent=5 // pred_check
        %p103 = pneg %p102
      $region18: #{tpu_custom_call.1} parent=5 // pred_check_branch
        %105 = sbr.rel (%p103) target = $region20
      $region19: #{tpu_custom_call.1} parent=5 // pred_region
        // Predicated region
        $region21: #{tpu_custom_call.1} parent=19 // pred_check
          %p106 = pneg %p31
        $region22: #{tpu_custom_call.1} parent=19 // pred_check_branch
          %108 = sbr.rel (%p106) target = $region24
        $region23: #{tpu_custom_call.1} parent=19 // pred_region
          %p109 = scmp.lt.s32.totalorder %s11, 1
          %s110 = scalar_select %p109, %s11, 1
          %s111 = smul.addr %s110, 4
          %s112 = smul.addr %s111, 2
          %s113 = scalar_lea.vmem %s0, %s112
        $region24: #{tpu_custom_call.1} parent=19 // pred_fallthru
          _
      $region20: #{tpu_custom_call.1} parent=5 // pred_fallthru
        _
      %p114 = scmp.le.s32.totalorder 1, %s11
      %p115 = scmp.lt.s32.totalorder %s11, 3
      %p116 = pnand %p114, %p115
      %p117 = pneg %p116
      // Predicated region
      $region25: #{tpu_custom_call.1} parent=5 // pred_check
        _
      $region26: #{tpu_custom_call.1} parent=5 // pred_check_branch
        %119 = sbr.rel (%p116) target = $region28
      $region27: #{tpu_custom_call.1} parent=5 // pred_region
        %s120 = ssub.s32 %s11, 1
        %p121 = scmp.lt.s32.totalorder %s16, 1
        %s122 = scalar_select %p121, %s16, 1
        %s123 = smul.addr %s122, 4
        %s124 = smul.addr %s123, 2
        %s125 = scalar_lea.vmem %s0, %s124
        %p126 = pneg %p37
        %p127 = pneg %p34
        %p128 = pneg %p58
        %p129 = pneg %p55
        %p130 = pneg %p84
        %p131 = pneg %p81
        %s132 = sand.u32 %s71, 1
        %s133 = scalar_lea.sflag [#allocation3], %s132
        %s134 = sand.u32 %s71, 1
        %s135 = smul.addr %s134, 8
        %s136 = scalar_lea.vmem [#allocation2], %s135
        %p137 = scmp.lt.s32.totalorder %s16, 1
        %s138 = scalar_select %p137, %s16, 1
        %s139 = smul.addr %s138, 4
        %s140 = smul.addr %s139, 2
        %s141 = scalar_lea.vmem %s0, %s140
        %v143 = vld [vmem:[%s141] sm:$0x3]
        %v144 = vld [vmem:[%s1] sm:$0xf]
        %s145 = scalar_lea.vmem %s141, 2
        %v146 = vld [vmem:[%s145] sm:$0x3]
        %s147 = scalar_lea.vmem %s1, 4
        %v148 = vld [vmem:[%s147] sm:$0xf]
        %vm149 = vcmask 31744
        %v151 = vsel %vm149, %v148, 0
        %vm153 = vcmask 1041408
        %v155 = vsel %vm153, %v146, 0
        %157 = vmatpush.bf16.msra.mxu0 0
        %158 = vmatpush.bf16.msra.mxu0 0
        %159 = vmatpush.bf16.msra.mxu0 0
        %160 = vmatpush.bf16.msra.mxu0 0
        %161 = vmatpush.bf16.msra.mxu0 0
        %162 = vmatpush.bf16.msra.mxu0 0
        %163 = vmatpush.bf16.msra.mxu0 0
        %164 = vmatpush.bf16.msra.mxu0 %v155
        %165 = vmatmul.bf16.gmra.mxu0 %v151
        %v166 = vpop.f32.mrf.mxu0
        %v167 = vadd.f32 0.0, %v166
        %v168 = vpop.f32.mrf.mxu0
        %169 = vdwg.mxu0
        %v171 = vsel %vm149, %v144, 0
        %v174 = vsel %vm153, %v143, 0
        %176 = vmatpush.bf16.msra.mxu0 0
        %177 = vmatpush.bf16.msra.mxu0 0
        %178 = vmatpush.bf16.msra.mxu0 0
        %179 = vmatpush.bf16.msra.mxu0 0
        %180 = vmatpush.bf16.msra.mxu0 0
        %181 = vmatpush.bf16.msra.mxu0 0
        %182 = vmatpush.bf16.msra.mxu0 0
        %183 = vmatpush.bf16.msra.mxu0 %v174
        %184 = vmatmul.bf16.gmra.mxu0 %v171
        %v185 = vpop.f32.mrf.mxu0
        %v186 = vadd.f32 %v167, %v185
        %v187 = vpop.f32.mrf.mxu0
        %188 = vdwg.mxu0
        %s189 = scalar_lea.vmem %s1, 8
        %v190 = vld [vmem:[%s189] sm:$0xf]
        %191 = vst [vmem:[#allocation1] ss:$4 sm:$0xff] %v143
        %v192 = vld.sshfl [vmem:[#allocation1] sm:$0xff pattern:$0x73625140]
        %194 = vrot.lane.b32.xlu0 %v192, 127
        %v195 = vpop.permute.xlu0 %194
        %v197 = vsel %vm149, %v190, 0
        %v200 = vsel %vm153, %v195, 0
        %202 = vmatpush.bf16.msra.mxu0 0
        %203 = vmatpush.bf16.msra.mxu0 0
        %204 = vmatpush.bf16.msra.mxu0 0
        %205 = vmatpush.bf16.msra.mxu0 0
        %206 = vmatpush.bf16.msra.mxu0 0
        %207 = vmatpush.bf16.msra.mxu0 0
        %208 = vmatpush.bf16.msra.mxu0 0
        %209 = vmatpush.bf16.msra.mxu0 %v200
        %210 = vmatmul.bf16.gmra.mxu0 %v197
        %v211 = vpop.f32.mrf.mxu0
        %v212 = vadd.f32 0.0, %v211
        %v213 = vpop.f32.mrf.mxu0
        %214 = vdwg.mxu0
        %v215 = vadd.f32 %v186, %v212
        %v216 = vld [vmem:[%s145] sm:$0x3]
        %s217 = scalar_lea.vmem %s1, 12
        %v218 = vld [vmem:[%s217] sm:$0xf]
        %220 = vst [vmem:[#allocation1] ss:$4 sm:$0xff] %v216
        %v221 = vld.sshfl [vmem:[#allocation1] sm:$0xff pattern:$0x73625140]
        %223 = vrot.lane.b32.xlu0 %v221, 127
        %v224 = vpop.permute.xlu0 %223
        %v226 = vsel %vm149, %v218, 0
        %v229 = vsel %vm153, %v224, 0
        %231 = vmatpush.bf16.msra.mxu0 0
        %232 = vmatpush.bf16.msra.mxu0 0
        %233 = vmatpush.bf16.msra.mxu0 0
        %234 = vmatpush.bf16.msra.mxu0 0
        %235 = vmatpush.bf16.msra.mxu0 0
        %236 = vmatpush.bf16.msra.mxu0 0
        %237 = vmatpush.bf16.msra.mxu0 0
        %238 = vmatpush.bf16.msra.mxu0 %v229
        %239 = vmatmul.bf16.gmra.mxu0 %v226
        %v240 = vpop.f32.mrf.mxu0
        %v241 = vadd.f32 0.0, %v240
        %v242 = vpop.f32.mrf.mxu0
        %243 = vdwg.mxu0
        %v244 = vadd.f32 %v215, %v241
        %v245 = vld [vmem:[%s141] sm:$0x3]
        %s246 = scalar_lea.vmem %s1, 16
        %v247 = vld [vmem:[%s246] sm:$0xf]
        %249 = vst [vmem:[#allocation1] ss:$4 sm:$0xff] %v245
        %v250 = vld.sshfl [vmem:[#allocation1] sm:$0xff pattern:$0x73625140]
        %252 = vrot.lane.b32.xlu0 %v250, 126
        %v253 = vpop.permute.xlu0 %252
        %v255 = vsel %vm149, %v247, 0
        %v258 = vsel %vm153, %v253, 0
        %260 = vmatpush.bf16.msra.mxu0 0
        %261 = vmatpush.bf16.msra.mxu0 0
        %262 = vmatpush.bf16.msra.mxu0 0
        %263 = vmatpush.bf16.msra.mxu0 0
        %264 = vmatpush.bf16.msra.mxu0 0
        %265 = vmatpush.bf16.msra.mxu0 0
        %266 = vmatpush.bf16.msra.mxu0 0
        %267 = vmatpush.bf16.msra.mxu0 %v258
        %268 = vmatmul.bf16.gmra.mxu0 %v255
        %v269 = vpop.f32.mrf.mxu0
        %v270 = vadd.f32 0.0, %v269
        %v271 = vpop.f32.mrf.mxu0
        %272 = vdwg.mxu0
        %v273 = vadd.f32 %v244, %v270
        %s274 = scalar_lea.vmem %s141, 4
        %v275 = vld [vmem:[%s274] sm:$0x3]
        %s276 = scalar_lea.vmem %s1, 20
        %v277 = vld [vmem:[%s276] sm:$0xf]
        %v279 = vsel %vm149, %v277, 0
        %v282 = vsel %vm153, %v275, 0
        %284 = vmatpush.bf16.msra.mxu0 0
        %285 = vmatpush.bf16.msra.mxu0 0
        %286 = vmatpush.bf16.msra.mxu0 0
        %287 = vmatpush.bf16.msra.mxu0 0
        %288 = vmatpush.bf16.msra.mxu0 0
        %289 = vmatpush.bf16.msra.mxu0 0
        %290 = vmatpush.bf16.msra.mxu0 0
        %291 = vmatpush.bf16.msra.mxu0 %v282
        %292 = vmatmul.bf16.gmra.mxu0 %v279
        %v293 = vpop.f32.mrf.mxu0
        %v294 = vadd.f32 0.0, %v293
        %v295 = vpop.f32.mrf.mxu0
        %296 = vdwg.mxu0
        %v297 = vadd.f32 %v273, %v294
        %s298 = scalar_lea.vmem %s141, 6
        %v299 = vld [vmem:[%s298] sm:$0x3]
        %s300 = scalar_lea.vmem %s1, 24
        %v301 = vld [vmem:[%s300] sm:$0xf]
        %v303 = vsel %vm149, %v301, 0
        %v306 = vsel %vm153, %v299, 0
        %308 = vmatpush.bf16.msra.mxu0 0
        %309 = vmatpush.bf16.msra.mxu0 0
        %310 = vmatpush.bf16.msra.mxu0 0
        %311 = vmatpush.bf16.msra.mxu0 0
        %312 = vmatpush.bf16.msra.mxu0 0
        %313 = vmatpush.bf16.msra.mxu0 0
        %314 = vmatpush.bf16.msra.mxu0 0
        %315 = vmatpush.bf16.msra.mxu0 %v306
        %316 = vmatmul.bf16.gmra.mxu0 %v303
        %v317 = vpop.f32.mrf.mxu0
        %v318 = vadd.f32 0.0, %v317
        %v319 = vpop.f32.mrf.mxu0
        %320 = vdwg.mxu0
        %v321 = vadd.f32 %v297, %v318
        %s322 = scalar_lea.vmem %s1, 28
        %v323 = vld [vmem:[%s322] sm:$0xf]
        %324 = vst [vmem:[#allocation1] ss:$4 sm:$0xff] %v275
        %v325 = vld.sshfl [vmem:[#allocation1] sm:$0xff pattern:$0x73625140]
        %327 = vrot.lane.b32.xlu0 %v325, 127
        %v328 = vpop.permute.xlu0 %327
        %v330 = vsel %vm149, %v323, 0
        %v333 = vsel %vm153, %v328, 0
        %335 = vmatpush.bf16.msra.mxu0 0
        %336 = vmatpush.bf16.msra.mxu0 0
        %337 = vmatpush.bf16.msra.mxu0 0
        %338 = vmatpush.bf16.msra.mxu0 0
        %339 = vmatpush.bf16.msra.mxu0 0
        %340 = vmatpush.bf16.msra.mxu0 0
        %341 = vmatpush.bf16.msra.mxu0 0
        %342 = vmatpush.bf16.msra.mxu0 %v333
        %343 = vmatmul.bf16.gmra.mxu0 %v330
        %v344 = vpop.f32.mrf.mxu0
        %v345 = vadd.f32 0.0, %v344
        %v346 = vpop.f32.mrf.mxu0
        %347 = vdwg.mxu0
        %v348 = vadd.f32 %v321, %v345
        %v349 = vld [vmem:[%s298] sm:$0x3]
        %s350 = scalar_lea.vmem %s1, 32
        %v351 = vld [vmem:[%s350] sm:$0xf]
        %353 = vst [vmem:[#allocation1] ss:$4 sm:$0xff] %v349
        %v354 = vld.sshfl [vmem:[#allocation1] sm:$0xff pattern:$0x73625140]
        %356 = vrot.lane.b32.xlu0 %v354, 127
        %v357 = vpop.permute.xlu0 %356
        %v359 = vsel %vm149, %v351, 0
        %v362 = vsel %vm153, %v357, 0
        %364 = vmatpush.bf16.msra.mxu0 0
        %365 = vmatpush.bf16.msra.mxu0 0
        %366 = vmatpush.bf16.msra.mxu0 0
        %367 = vmatpush.bf16.msra.mxu0 0
        %368 = vmatpush.bf16.msra.mxu0 0
        %369 = vmatpush.bf16.msra.mxu0 0
        %370 = vmatpush.bf16.msra.mxu0 0
        %371 = vmatpush.bf16.msra.mxu0 %v362
        %372 = vmatmul.bf16.gmra.mxu0 %v359
        %v373 = vpop.f32.mrf.mxu0
        %v374 = vadd.f32 0.0, %v373
        %v375 = vpop.f32.mrf.mxu0
        %376 = vdwg.mxu0
        %v377 = vadd.f32 %v348, %v374
        %v378 = vld [vmem:[%s274] sm:$0x3]
        %s379 = scalar_lea.vmem %s1, 36
        %v380 = vld [vmem:[%s379] sm:$0xf]
        %382 = vst [vmem:[#allocation1] ss:$4 sm:$0xff] %v378
        %v383 = vld.sshfl [vmem:[#allocation1] sm:$0xff pattern:$0x73625140]
        %385 = vrot.lane.b32.xlu0 %v383, 126
        %v386 = vpop.permute.xlu0 %385
        %v388 = vsel %vm149, %v380, 0
        %v391 = vsel %vm153, %v386, 0
        %393 = vmatpush.bf16.msra.mxu0 0
        %394 = vmatpush.bf16.msra.mxu0 0
        %395 = vmatpush.bf16.msra.mxu0 0
        %396 = vmatpush.bf16.msra.mxu0 0
        %397 = vmatpush.bf16.msra.mxu0 0
        %398 = vmatpush.bf16.msra.mxu0 0
        %399 = vmatpush.bf16.msra.mxu0 0
        %400 = vmatpush.bf16.msra.mxu0 %v391
        %401 = vmatmul.bf16.gmra.mxu0 %v388
        %v402 = vpop.f32.mrf.mxu0
        %v403 = vadd.f32 0.0, %v402
        %v404 = vpop.f32.mrf.mxu0
        %405 = vdwg.mxu0
        %v406 = vadd.f32 %v377, %v403
        %v407 = vld [vmem:[%s141] sm:$0x3]
        %s408 = scalar_lea.vmem %s1, 40
        %v409 = vld [vmem:[%s408] sm:$0xf]
        %411 = vst [vmem:[#allocation1] ss:$4 sm:$0xff] %v407
        %v412 = vld.sshfl [vmem:[#allocation1] sm:$0xff pattern:$0x73625140]
        %414 = vrot.lane.b32.xlu0 %v412, 118
        %v415 = vpop.permute.xlu0 %414
        %v417 = vsel %vm149, %v409, 0
        %v420 = vsel %vm153, %v415, 0
        %422 = vmatpush.bf16.msra.mxu0 0
        %423 = vmatpush.bf16.msra.mxu0 0
        %424 = vmatpush.bf16.msra.mxu0 0
        %425 = vmatpush.bf16.msra.mxu0 0
        %426 = vmatpush.bf16.msra.mxu0 0
        %427 = vmatpush.bf16.msra.mxu0 0
        %428 = vmatpush.bf16.msra.mxu0 0
        %429 = vmatpush.bf16.msra.mxu0 %v420
        %430 = vmatmul.bf16.gmra.mxu0 %v417
        %v431 = vpop.f32.mrf.mxu0
        %v432 = vadd.f32 0.0, %v431
        %v433 = vpop.f32.mrf.mxu0
        %434 = vdwg.mxu0
        %v435 = vadd.f32 %v406, %v432
        %v436 = vld [vmem:[%s145] sm:$0x3]
        %s437 = scalar_lea.vmem %s1, 44
        %v438 = vld [vmem:[%s437] sm:$0xf]
        %440 = vst [vmem:[#allocation1] ss:$4 sm:$0xff] %v436
        %v441 = vld.sshfl [vmem:[#allocation1] sm:$0xff pattern:$0x73625140]
        %443 = vrot.lane.b32.xlu0 %v441, 118
        %v444 = vpop.permute.xlu0 %443
        %v446 = vsel %vm149, %v438, 0
        %v449 = vsel %vm153, %v444, 0
        %451 = vmatpush.bf16.msra.mxu0 0
        %452 = vmatpush.bf16.msra.mxu0 0
        %453 = vmatpush.bf16.msra.mxu0 0
        %454 = vmatpush.bf16.msra.mxu0 0
        %455 = vmatpush.bf16.msra.mxu0 0
        %456 = vmatpush.bf16.msra.mxu0 0
        %457 = vmatpush.bf16.msra.mxu0 0
        %458 = vmatpush.bf16.msra.mxu0 %v449
        %459 = vmatmul.bf16.gmra.mxu0 %v446
        %v460 = vpop.f32.mrf.mxu0
        %v461 = vadd.f32 0.0, %v460
        %v462 = vpop.f32.mrf.mxu0
        %463 = vdwg.mxu0
        %v464 = vadd.f32 %v435, %v461
        %v465 = vld [vmem:[%s141] sm:$0x3]
        %s466 = scalar_lea.vmem %s1, 48
        %v467 = vld [vmem:[%s466] sm:$0xf]
        %469 = vst [vmem:[#allocation1] ss:$4 sm:$0xff] %v465
        %v470 = vld.sshfl [vmem:[#allocation1] sm:$0xff pattern:$0x73625140]
        %472 = vrot.lane.b32.xlu0 %v470, 117
        %v473 = vpop.permute.xlu0 %472
        %v475 = vsel %vm149, %v467, 0
        %v478 = vsel %vm153, %v473, 0
        %480 = vmatpush.bf16.msra.mxu0 0
        %481 = vmatpush.bf16.msra.mxu0 0
        %482 = vmatpush.bf16.msra.mxu0 0
        %483 = vmatpush.bf16.msra.mxu0 0
        %484 = vmatpush.bf16.msra.mxu0 0
        %485 = vmatpush.bf16.msra.mxu0 0
        %486 = vmatpush.bf16.msra.mxu0 0
        %487 = vmatpush.bf16.msra.mxu0 %v478
        %488 = vmatmul.bf16.gmra.mxu0 %v475
        %v489 = vpop.f32.mrf.mxu0
        %v490 = vadd.f32 0.0, %v489
        %v491 = vpop.f32.mrf.mxu0
        %492 = vdwg.mxu0
        %v493 = vadd.f32 %v464, %v490
        %v494 = vld [vmem:[%s145] sm:$0x3]
        %s495 = scalar_lea.vmem %s1, 52
        %v496 = vld [vmem:[%s495] sm:$0xf]
        %498 = vst [vmem:[#allocation1] ss:$4 sm:$0xff] %v494
        %v499 = vld.sshfl [vmem:[#allocation1] sm:$0xff pattern:$0x73625140]
        %501 = vrot.lane.b32.xlu0 %v499, 117
        %v502 = vpop.permute.xlu0 %501
        %v504 = vsel %vm149, %v496, 0
        %v507 = vsel %vm153, %v502, 0
        %509 = vmatpush.bf16.msra.mxu0 0
        %510 = vmatpush.bf16.msra.mxu0 0
        %511 = vmatpush.bf16.msra.mxu0 0
        %512 = vmatpush.bf16.msra.mxu0 0
        %513 = vmatpush.bf16.msra.mxu0 0
        %514 = vmatpush.bf16.msra.mxu0 0
        %515 = vmatpush.bf16.msra.mxu0 0
        %516 = vmatpush.bf16.msra.mxu0 %v507
        %517 = vmatmul.bf16.gmra.mxu0 %v504
        %v518 = vpop.f32.mrf.mxu0
        %v519 = vadd.f32 0.0, %v518
        %v520 = vpop.f32.mrf.mxu0
        %521 = vdwg.mxu0
        %v522 = vadd.f32 %v493, %v519
        %v523 = vld [vmem:[%s141] sm:$0x3]
        %s524 = scalar_lea.vmem %s1, 56
        %v525 = vld [vmem:[%s524] sm:$0xf]
        %527 = vst [vmem:[#allocation1] ss:$4 sm:$0xff] %v523
        %v528 = vld.sshfl [vmem:[#allocation1] sm:$0xff pattern:$0x73625140]
        %530 = vrot.lane.b32.xlu0 %v528, 116
        %v531 = vpop.permute.xlu0 %530
        %v533 = vsel %vm149, %v525, 0
        %v536 = vsel %vm153, %v531, 0
        %538 = vmatpush.bf16.msra.mxu0 0
        %539 = vmatpush.bf16.msra.mxu0 0
        %540 = vmatpush.bf16.msra.mxu0 0
        %541 = vmatpush.bf16.msra.mxu0 0
        %542 = vmatpush.bf16.msra.mxu0 0
        %543 = vmatpush.bf16.msra.mxu0 0
        %544 = vmatpush.bf16.msra.mxu0 0
        %545 = vmatpush.bf16.msra.mxu0 %v536
        %546 = vmatmul.bf16.gmra.mxu0 %v533
        %v547 = vpop.f32.mrf.mxu0
        %v548 = vadd.f32 0.0, %v547
        %v549 = vpop.f32.mrf.mxu0
        %550 = vdwg.mxu0
        %v551 = vadd.f32 %v522, %v548
        %vm552 = vcmask 654336
        %553 = vst.msk [vmem:[%s136] sm:$0xff] %vm552, %v551
        %s554 = sand.u32 %s71, 1
        %s555 = scalar_lea.sflag [#allocation3], %s554
        %s556 = sand.u32 %s71, 1
        %s557 = smul.addr %s556, 8
        %s558 = scalar_lea.vmem [#allocation2], %s557
        // Predicated region
        $region29: #{tpu_custom_call.1} parent=27 // pred_check
          %p559 = pneg %p81
        $region30: #{tpu_custom_call.1} parent=27 // pred_check_branch
          %561 = sbr.rel (%p559) target = $region32
        $region31: #{tpu_custom_call.1} parent=27 // pred_region
          %563 = vsyncadd %s555, 0
          %s564 = smul.addr %s16, 8
          %s565 = scalar_lea.hbm %s2, %s564
          %s567 = sshll.u32 %s558, 4
          %s568 = int_to_ptr.vmem [resolvable:$true] %s567
          %s569 = sshll.u32 %s565, 4
          %s570 = int_to_ptr.hbm [resolvable:$true] %s569
          %572 = dma.vmem_to_hbm [thread:$0]  %s568, 128, %s570, %s555
        $region32: #{tpu_custom_call.1} parent=27 // pred_fallthru
          _
      $region28: #{tpu_custom_call.1} parent=5 // pred_fallthru
        _
      %p573 = scmp.le.s32.totalorder 2, %s11
      // Predicated region
      $region33: #{tpu_custom_call.1} parent=5 // pred_check
        %p574 = pneg %p573
      $region34: #{tpu_custom_call.1} parent=5 // pred_check_branch
        %576 = sbr.rel (%p574) target = $region36
      $region35: #{tpu_custom_call.1} parent=5 // pred_region
        %s577 = ssub.s32 %s11, 2
        // Predicated region
        $region37: #{tpu_custom_call.1} parent=35 // pred_check
          %p578 = pneg %p87
        $region38: #{tpu_custom_call.1} parent=35 // pred_check_branch
          %580 = sbr.rel (%p578) target = $region40
        $region39: #{tpu_custom_call.1} parent=35 // pred_region
          %s581 = sand.u32 %s72, 1
          %s582 = scalar_lea.sflag [#allocation3], %s581
          %s583 = sand.u32 %s72, 1
          %s584 = smul.addr %s583, 8
          %s585 = scalar_lea.vmem [#allocation2], %s584
          %587 = dma.done %s582, 128
        $region40: #{tpu_custom_call.1} parent=35 // pred_fallthru
          _
      $region36: #{tpu_custom_call.1} parent=5 // pred_fallthru
        _
    $region6: #{tpu_custom_call.1} parent=1 // loop_footer
      %s15 = sadd.s32 1, %s11
    $region7: #{tpu_custom_call.1} parent=1 // loop_footer_branch
      %10 = sbr.rel target = $region3
    $region8: #{tpu_custom_call.1} parent=1 // loop_exit
      _
    %588 = vsyncpa [#allocation3], 1
    %s589 = scalar_lea.sflag [#allocation3], 1
    %590 = vsyncpa %s589, 1

</llo_original>
